<compile_context>
chip_gen: v7x
topology: tpu7x:2x2x1
jax: 0.10.0
libtpu: 0.0.40
codegen_flags: <defaults>
</compile_context>

<pallas_src>
import functools

import jax
import jax.numpy as jnp
from jax.experimental import pallas as pl
from jax.experimental.pallas import tpu as pltpu


def target_attention_kernel(x_ref, w_ref, gamma_ref, beta_ref, o_ref,
                            *, batch, seq, head_num, use_res, eps):
    # x_ref: (B*T, E) slab; w_ref: (E, (3+use_res)*E) fused [Wq*scale|Wk|Wv|Wres].
    E = x_ref.shape[1]
    d = E // head_num

    x16 = x_ref[...].astype(jnp.bfloat16)

    # One lane-dense projection matmul, f32 accumulation.
    proj = jnp.dot(x16, w_ref[...].astype(jnp.bfloat16),
                   preferred_element_type=jnp.float32)   # (B*T, 3E or 4E)

    # Hoisted bf16 casts (once each, not per (b,h) slice).
    q16 = proj[:, 0:E].astype(jnp.bfloat16)
    k16 = proj[:, E:2 * E].astype(jnp.bfloat16)
    v16 = proj[:, 2 * E:3 * E].astype(jnp.bfloat16)

    # Contract feature dims of q_h and k_h (q_h . k_h^T) without materializing
    # a transpose.
    qk_dims = (((1,), (1,)), ((), ()))

    # batch / head loops are tiny static ints -> fully unrolled.
    for b in range(batch):
        r0 = b * seq
        head_outs = []
        for h in range(head_num):
            c0 = h * d
            qh = q16[r0:r0 + seq, c0:c0 + d]
            kh = k16[r0:r0 + seq, c0:c0 + d]
            vh = v16[r0:r0 + seq, c0:c0 + d]

            # 1/sqrt(d) is already folded into the Wq columns.
            scores = jax.lax.dot_general(qh, kh, qk_dims,
                                         preferred_element_type=jnp.float32)

            # Softmax over the key dim (f32; approx reciprocal on the EUP —
            # ~2^-12 rel. error, well within tolerance here).
            scores = scores - jnp.max(scores, axis=-1, keepdims=True)
            p = jnp.exp(scores)
            p = p * pl.reciprocal(jnp.sum(p, axis=-1, keepdims=True),
                                  approx=True)
            # TODO(synk): attn_dropout omitted (identity in eval mode)

            head_outs.append(jnp.dot(p.astype(jnp.bfloat16), vh,
                                     preferred_element_type=jnp.float32))

        # Lane-concat of head outputs -> (T, E), kept in registers.
        res_b = jnp.concatenate(head_outs, axis=1)
        # TODO(synk): dropout omitted (identity in eval mode)

        if use_res:
            res_b = res_b + proj[r0:r0 + seq, 3 * E:4 * E]   # residual slice (f32)

        res_b = jnp.maximum(res_b, 0.0)                      # ReLU

        # LayerNorm over the embedding dim.
        mean = jnp.mean(res_b, axis=-1, keepdims=True)
        centered = res_b - mean
        var = jnp.mean(centered * centered, axis=-1, keepdims=True)
        inv = jax.lax.rsqrt(var + eps)
        out_b = centered * inv * gamma_ref[...] + beta_ref[...]  # gamma/beta: (1, E)

        # Single store per batch row-block (sublane-aligned: r0 multiple of 8).
        o_ref[r0:r0 + seq, :] = out_b.astype(o_ref.dtype)


def target_attention(x, wq, wk, wv, wres, gamma, beta,
                     *, head_num=2, scaling=True, use_res=True):
    B, T, E = x.shape
    assert E % head_num == 0, "embedding_size must be a multiple of head_num"
    d = E // head_num

    # Fold the attention scale into Wq, then fuse all projection weights along
    # the output dim -> (E, 4E) = (32, 128) lane-dense matrix.
    wq_eff = wq * (1.0 / (float(d) ** 0.5)) if scaling else wq
    mats = [wq_eff, wk, wv]
    if use_res:
        mats.append(wres)
    w_fused = jnp.concatenate(mats, axis=1)          # (E, 3E or 4E)
    W = w_fused.shape[1]

    x2 = x.reshape(B * T, E)                          # single input slab
    gamma2 = gamma.reshape(1, E)
    beta2 = beta.reshape(1, E)

    kernel = functools.partial(
        target_attention_kernel,
        batch=B, seq=T, head_num=head_num, use_res=use_res, eps=1e-6)

    out2 = pl.pallas_call(
        kernel,
        out_shape=jax.ShapeDtypeStruct((B * T, E), jnp.float32),
        grid=(1,),                                    # single step, single TC
        in_specs=[
            pl.BlockSpec((B * T, E), lambda i: (0, 0)),   # x (full slab)
            pl.BlockSpec((E, W), lambda i: (0, 0)),        # fused Wq|Wk|Wv|Wres
            pl.BlockSpec((1, E), lambda i: (0, 0)),        # layer_norm gamma
            pl.BlockSpec((1, E), lambda i: (0, 0)),        # layer_norm beta
        ],
        out_specs=pl.BlockSpec((B * T, E), lambda i: (0, 0)),
        compiler_params=pltpu.CompilerParams(
            dimension_semantics=("arbitrary",)),
    )(x2, w_fused, gamma2, beta2)

    return out2.reshape(B, T, E)


def reference(x, wq, wk, wv, wres, gamma, beta,
              *, head_num=2, scaling=True, use_res=True):
    """Pure-JAX reference mirroring the PyTorch forward (eval mode)."""
    B, T, E = x.shape
    d = E // head_num
    q = jnp.einsum('bte,ef->btf', x, wq)
    k = jnp.einsum('bte,ef->btf', x, wk)
    v = jnp.einsum('bte,ef->btf', x, wv)
    qh = jnp.stack(jnp.split(q, head_num, axis=2))
    kh = jnp.stack(jnp.split(k, head_num, axis=2))
    vh = jnp.stack(jnp.split(v, head_num, axis=2))
    scores = jnp.einsum('hbik,hbjk->hbij', qh, kh)
    if scaling:
        scores = scores / (float(d) ** 0.5)
    attn = jax.nn.softmax(scores, axis=-1)
    res = jnp.einsum('hbij,hbjk->hbik', attn, vh)                       # (H,B,T,d)
    res = jnp.concatenate(jnp.split(res, head_num, axis=0), axis=-1)[0]  # (B,T,E)
    if use_res:
        res = res + jnp.einsum('bte,ef->btf', x, wres)
    res = jax.nn.relu(res)
    mean = jnp.mean(res, axis=-1, keepdims=True)
    var = jnp.mean((res - mean) ** 2, axis=-1, keepdims=True)
    normed = (res - mean) / jnp.sqrt(var + 1e-6)
    return normed * gamma + beta


if __name__ == "__main__":
    B, T, E = 2, 8, 32
    head_num = 2

    key = jax.random.PRNGKey(0)
    kx, kq, kk, kv, kr, kg, kb = jax.random.split(key, 7)

    x = jax.random.normal(kx, (B, T, E), dtype=jnp.float32)
    # all module parameters are initialized ~ N(0, 0.05) (incl. layer-norm affine)
    wq = 0.05 * jax.random.normal(kq, (E, E), dtype=jnp.float32)
    wk = 0.05 * jax.random.normal(kk, (E, E), dtype=jnp.float32)
    wv = 0.05 * jax.random.normal(kv, (E, E), dtype=jnp.float32)
    wres = 0.05 * jax.random.normal(kr, (E, E), dtype=jnp.float32)
    gamma = 0.05 * jax.random.normal(kg, (E,), dtype=jnp.float32)
    beta = 0.05 * jax.random.normal(kb, (E,), dtype=jnp.float32)

    out = target_attention(x, wq, wk, wv, wres, gamma, beta,
                           head_num=head_num, scaling=True, use_res=True)
    out = jax.block_until_ready(out)

    ref = reference(x, wq, wk, wv, wres, gamma, beta,
                    head_num=head_num, scaling=True, use_res=True)
    assert out.shape == (B, T, E)
    assert jnp.allclose(out, ref, atol=2e-2, rtol=2e-2)

    print("KERNEL_OK")
</pallas_src>

<mosaic_0001>
module attributes {stable_mosaic.version = 11 : i64} {
  func.func @target_attention_kernel(%arg0: i32, %arg1: memref<16x32xf32, #tpu.memory_space<vmem>>, %arg2: memref<32x128xf32, #tpu.memory_space<vmem>>, %arg3: memref<1x32xf32, #tpu.memory_space<vmem>>, %arg4: memref<1x32xf32, #tpu.memory_space<vmem>>, %arg5: memref<16x32xf32, #tpu.memory_space<vmem>>) attributes {dimension_semantics = [#tpu.dimension_semantics<arbitrary>], iteration_bounds = array<i64: 1>, scalar_prefetch = 0 : i64, scratch_operands = 0 : i64, tpu.core_type = #tpu.core_type<tc>, window_params = [{pipeline_mode = #tpu.pipeline_mode<synchronous>, transform_indices = @transform_0, window_bounds = array<i64: 16, 32>}, {pipeline_mode = #tpu.pipeline_mode<synchronous>, transform_indices = @transform_1, window_bounds = array<i64: 32, 128>}, {pipeline_mode = #tpu.pipeline_mode<synchronous>, transform_indices = @transform_2, window_bounds = array<i64: 1, 32>}, {pipeline_mode = #tpu.pipeline_mode<synchronous>, transform_indices = @transform_3, window_bounds = array<i64: 1, 32>}, {pipeline_mode = #tpu.pipeline_mode<synchronous>, transform_indices = @transform_4, window_bounds = array<i64: 16, 32>}]} {
    %c0 = arith.constant 0 : index
    %c0_0 = arith.constant 0 : index
    %0 = vector.load %arg1[%c0, %c0_0] : memref<16x32xf32, #tpu.memory_space<vmem>>, vector<16x32xf32>
    %1 = arith.truncf %0 : vector<16x32xf32> to vector<16x32xbf16>
    %c0_1 = arith.constant 0 : index
    %c0_2 = arith.constant 0 : index
    %2 = vector.load %arg2[%c0_1, %c0_2] : memref<32x128xf32, #tpu.memory_space<vmem>>, vector<32x128xf32>
    %3 = arith.truncf %2 : vector<32x128xf32> to vector<32x128xbf16>
    %cst = arith.constant dense<0.000000e+00> : vector<16x128xf32>
    %4 = tpu.matmul %1, %3, %cst {dimension_numbers = #tpu.dot_dimension_numbers<[1], [0], [0], [1], [0, 0, 1, 1], [], []>} : vector<16x32xbf16>, vector<32x128xbf16>, vector<16x128xf32> -> vector<16x128xf32>
    %5 = vector.extract_strided_slice %4 {offsets = [0, 0], sizes = [16, 32], strides = [1, 1]} : vector<16x128xf32> to vector<16x32xf32>
    %6 = arith.truncf %5 : vector<16x32xf32> to vector<16x32xbf16>
    %7 = vector.extract_strided_slice %4 {offsets = [0, 32], sizes = [16, 32], strides = [1, 1]} : vector<16x128xf32> to vector<16x32xf32>
    %8 = arith.truncf %7 : vector<16x32xf32> to vector<16x32xbf16>
    %9 = vector.extract_strided_slice %4 {offsets = [0, 64], sizes = [16, 32], strides = [1, 1]} : vector<16x128xf32> to vector<16x32xf32>
    %10 = arith.truncf %9 : vector<16x32xf32> to vector<16x32xbf16>
    %11 = vector.extract_strided_slice %6 {offsets = [0, 0], sizes = [8, 16], strides = [1, 1]} : vector<16x32xbf16> to vector<8x16xbf16>
    %12 = vector.extract_strided_slice %8 {offsets = [0, 0], sizes = [8, 16], strides = [1, 1]} : vector<16x32xbf16> to vector<8x16xbf16>
    %13 = vector.extract_strided_slice %10 {offsets = [0, 0], sizes = [8, 16], strides = [1, 1]} : vector<16x32xbf16> to vector<8x16xbf16>
    %cst_3 = arith.constant dense<0.000000e+00> : vector<8x8xf32>
    %14 = tpu.matmul %11, %12, %cst_3 {dimension_numbers = #tpu.dot_dimension_numbers<[1], [1], [0], [0], [0, 0, 1, 0], [], []>} : vector<8x16xbf16>, vector<8x16xbf16>, vector<8x8xf32> -> vector<8x8xf32>
    %cst_4 = arith.constant dense<0xFF800000> : vector<8xf32>
    %15 = vector.multi_reduction <maximumf>, %14, %cst_4 [1] : vector<8x8xf32> to vector<8xf32>
    %16 = vector.shape_cast %15 : vector<8xf32> to vector<8x1xf32>
    %17 = vector.broadcast %16 : vector<8x1xf32> to vector<8x8xf32>
    %18 = arith.subf %14, %17 : vector<8x8xf32>
    %19 = math.exp %18 : vector<8x8xf32>
    %cst_5 = arith.constant dense<0.000000e+00> : vector<8xf32>
    %20 = vector.multi_reduction <add>, %19, %cst_5 [1] : vector<8x8xf32> to vector<8xf32>
    %21 = vector.shape_cast %20 : vector<8xf32> to vector<8x1xf32>
    %22 = tpu.reciprocal %21 {approx = true} : vector<8x1xf32> -> vector<8x1xf32>
    %23 = vector.broadcast %22 : vector<8x1xf32> to vector<8x8xf32>
    %24 = arith.mulf %19, %23 : vector<8x8xf32>
    %25 = arith.truncf %24 : vector<8x8xf32> to vector<8x8xbf16>
    %cst_6 = arith.constant dense<0.000000e+00> : vector<8x16xf32>
    %26 = tpu.matmul %25, %13, %cst_6 {dimension_numbers = #tpu.dot_dimension_numbers<[1], [0], [0], [1], [0, 0, 1, 1], [], []>} : vector<8x8xbf16>, vector<8x16xbf16>, vector<8x16xf32> -> vector<8x16xf32>
    %27 = vector.extract_strided_slice %6 {offsets = [0, 16], sizes = [8, 16], strides = [1, 1]} : vector<16x32xbf16> to vector<8x16xbf16>
    %28 = vector.extract_strided_slice %8 {offsets = [0, 16], sizes = [8, 16], strides = [1, 1]} : vector<16x32xbf16> to vector<8x16xbf16>
    %29 = vector.extract_strided_slice %10 {offsets = [0, 16], sizes = [8, 16], strides = [1, 1]} : vector<16x32xbf16> to vector<8x16xbf16>
    %cst_7 = arith.constant dense<0.000000e+00> : vector<8x8xf32>
    %30 = tpu.matmul %27, %28, %cst_7 {dimension_numbers = #tpu.dot_dimension_numbers<[1], [1], [0], [0], [0, 0, 1, 0], [], []>} : vector<8x16xbf16>, vector<8x16xbf16>, vector<8x8xf32> -> vector<8x8xf32>
    %cst_8 = arith.constant dense<0xFF800000> : vector<8xf32>
    %31 = vector.multi_reduction <maximumf>, %30, %cst_8 [1] : vector<8x8xf32> to vector<8xf32>
    %32 = vector.shape_cast %31 : vector<8xf32> to vector<8x1xf32>
    %33 = vector.broadcast %32 : vector<8x1xf32> to vector<8x8xf32>
    %34 = arith.subf %30, %33 : vector<8x8xf32>
    %35 = math.exp %34 : vector<8x8xf32>
    %cst_9 = arith.constant dense<0.000000e+00> : vector<8xf32>
    %36 = vector.multi_reduction <add>, %35, %cst_9 [1] : vector<8x8xf32> to vector<8xf32>
    %37 = vector.shape_cast %36 : vector<8xf32> to vector<8x1xf32>
    %38 = tpu.reciprocal %37 {approx = true} : vector<8x1xf32> -> vector<8x1xf32>
    %39 = vector.broadcast %38 : vector<8x1xf32> to vector<8x8xf32>
    %40 = arith.mulf %35, %39 : vector<8x8xf32>
    %41 = arith.truncf %40 : vector<8x8xf32> to vector<8x8xbf16>
    %cst_10 = arith.constant dense<0.000000e+00> : vector<8x16xf32>
    %42 = tpu.matmul %41, %29, %cst_10 {dimension_numbers = #tpu.dot_dimension_numbers<[1], [0], [0], [1], [0, 0, 1, 1], [], []>} : vector<8x8xbf16>, vector<8x16xbf16>, vector<8x16xf32> -> vector<8x16xf32>
    %43 = tpu.concatenate %26, %42 in 1 : vector<8x16xf32>, vector<8x16xf32> -> vector<8x32xf32>
    %44 = vector.extract_strided_slice %4 {offsets = [0, 96], sizes = [8, 32], strides = [1, 1]} : vector<16x128xf32> to vector<8x32xf32>
    %45 = arith.addf %43, %44 : vector<8x32xf32>
    %cst_11 = arith.constant 0.000000e+00 : f32
    %46 = vector.broadcast %cst_11 : f32 to vector<8x32xf32>
    %47 = arith.maximumf %45, %46 : vector<8x32xf32>
    %cst_12 = arith.constant dense<0.000000e+00> : vector<8xf32>
    %48 = vector.multi_reduction <add>, %47, %cst_12 [1] : vector<8x32xf32> to vector<8xf32>
    %49 = vector.shape_cast %48 : vector<8xf32> to vector<8x1xf32>
    %cst_13 = arith.constant 3.200000e+01 : f32
    %50 = vector.broadcast %cst_13 : f32 to vector<8x1xf32>
    %51 = arith.divf %49, %50 : vector<8x1xf32>
    %52 = vector.broadcast %51 : vector<8x1xf32> to vector<8x32xf32>
    %53 = arith.subf %47, %52 : vector<8x32xf32>
    %54 = arith.mulf %53, %53 : vector<8x32xf32>
    %cst_14 = arith.constant dense<0.000000e+00> : vector<8xf32>
    %55 = vector.multi_reduction <add>, %54, %cst_14 [1] : vector<8x32xf32> to vector<8xf32>
    %56 = vector.shape_cast %55 : vector<8xf32> to vector<8x1xf32>
    %cst_15 = arith.constant 3.200000e+01 : f32
    %57 = vector.broadcast %cst_15 : f32 to vector<8x1xf32>
    %58 = arith.divf %56, %57 : vector<8x1xf32>
    %cst_16 = arith.constant 9.99999997E-7 : f32
    %59 = vector.broadcast %cst_16 : f32 to vector<8x1xf32>
    %60 = arith.addf %58, %59 : vector<8x1xf32>
    %61 = math.rsqrt %60 : vector<8x1xf32>
    %62 = vector.broadcast %61 : vector<8x1xf32> to vector<8x32xf32>
    %63 = arith.mulf %53, %62 : vector<8x32xf32>
    %c0_17 = arith.constant 0 : index
    %c0_18 = arith.constant 0 : index
    %64 = vector.load %arg3[%c0_17, %c0_18] : memref<1x32xf32, #tpu.memory_space<vmem>>, vector<1x32xf32>
    %65 = vector.broadcast %64 : vector<1x32xf32> to vector<8x32xf32>
    %66 = arith.mulf %63, %65 : vector<8x32xf32>
    %c0_19 = arith.constant 0 : index
    %c0_20 = arith.constant 0 : index
    %67 = vector.load %arg4[%c0_19, %c0_20] : memref<1x32xf32, #tpu.memory_space<vmem>>, vector<1x32xf32>
    %68 = vector.broadcast %67 : vector<1x32xf32> to vector<8x32xf32>
    %69 = arith.addf %66, %68 : vector<8x32xf32>
    %c0_21 = arith.constant 0 : index
    %c0_22 = arith.constant 0 : index
    %70 = vector.load %arg5[%c0_21, %c0_22] : memref<16x32xf32, #tpu.memory_space<vmem>>, vector<8x32xf32>
    tpu.vector_store %arg5[%c0_21, %c0_22], %69 {strides = array<i32>} : memref<16x32xf32, #tpu.memory_space<vmem>>, vector<8x32xf32>,
    %71 = vector.extract_strided_slice %6 {offsets = [8, 0], sizes = [8, 16], strides = [1, 1]} : vector<16x32xbf16> to vector<8x16xbf16>
    %72 = vector.extract_strided_slice %8 {offsets = [8, 0], sizes = [8, 16], strides = [1, 1]} : vector<16x32xbf16> to vector<8x16xbf16>
    %73 = vector.extract_strided_slice %10 {offsets = [8, 0], sizes = [8, 16], strides = [1, 1]} : vector<16x32xbf16> to vector<8x16xbf16>
    %cst_23 = arith.constant dense<0.000000e+00> : vector<8x8xf32>
    %74 = tpu.matmul %71, %72, %cst_23 {dimension_numbers = #tpu.dot_dimension_numbers<[1], [1], [0], [0], [0, 0, 1, 0], [], []>} : vector<8x16xbf16>, vector<8x16xbf16>, vector<8x8xf32> -> vector<8x8xf32>
    %cst_24 = arith.constant dense<0xFF800000> : vector<8xf32>
    %75 = vector.multi_reduction <maximumf>, %74, %cst_24 [1] : vector<8x8xf32> to vector<8xf32>
    %76 = vector.shape_cast %75 : vector<8xf32> to vector<8x1xf32>
    %77 = vector.broadcast %76 : vector<8x1xf32> to vector<8x8xf32>
    %78 = arith.subf %74, %77 : vector<8x8xf32>
    %79 = math.exp %78 : vector<8x8xf32>
    %cst_25 = arith.constant dense<0.000000e+00> : vector<8xf32>
    %80 = vector.multi_reduction <add>, %79, %cst_25 [1] : vector<8x8xf32> to vector<8xf32>
    %81 = vector.shape_cast %80 : vector<8xf32> to vector<8x1xf32>
    %82 = tpu.reciprocal %81 {approx = true} : vector<8x1xf32> -> vector<8x1xf32>
    %83 = vector.broadcast %82 : vector<8x1xf32> to vector<8x8xf32>
    %84 = arith.mulf %79, %83 : vector<8x8xf32>
    %85 = arith.truncf %84 : vector<8x8xf32> to vector<8x8xbf16>
    %cst_26 = arith.constant dense<0.000000e+00> : vector<8x16xf32>
    %86 = tpu.matmul %85, %73, %cst_26 {dimension_numbers = #tpu.dot_dimension_numbers<[1], [0], [0], [1], [0, 0, 1, 1], [], []>} : vector<8x8xbf16>, vector<8x16xbf16>, vector<8x16xf32> -> vector<8x16xf32>
    %87 = vector.extract_strided_slice %6 {offsets = [8, 16], sizes = [8, 16], strides = [1, 1]} : vector<16x32xbf16> to vector<8x16xbf16>
    %88 = vector.extract_strided_slice %8 {offsets = [8, 16], sizes = [8, 16], strides = [1, 1]} : vector<16x32xbf16> to vector<8x16xbf16>
    %89 = vector.extract_strided_slice %10 {offsets = [8, 16], sizes = [8, 16], strides = [1, 1]} : vector<16x32xbf16> to vector<8x16xbf16>
    %cst_27 = arith.constant dense<0.000000e+00> : vector<8x8xf32>
    %90 = tpu.matmul %87, %88, %cst_27 {dimension_numbers = #tpu.dot_dimension_numbers<[1], [1], [0], [0], [0, 0, 1, 0], [], []>} : vector<8x16xbf16>, vector<8x16xbf16>, vector<8x8xf32> -> vector<8x8xf32>
    %cst_28 = arith.constant dense<0xFF800000> : vector<8xf32>
    %91 = vector.multi_reduction <maximumf>, %90, %cst_28 [1] : vector<8x8xf32> to vector<8xf32>
    %92 = vector.shape_cast %91 : vector<8xf32> to vector<8x1xf32>
    %93 = vector.broadcast %92 : vector<8x1xf32> to vector<8x8xf32>
    %94 = arith.subf %90, %93 : vector<8x8xf32>
    %95 = math.exp %94 : vector<8x8xf32>
    %cst_29 = arith.constant dense<0.000000e+00> : vector<8xf32>
    %96 = vector.multi_reduction <add>, %95, %cst_29 [1] : vector<8x8xf32> to vector<8xf32>
    %97 = vector.shape_cast %96 : vector<8xf32> to vector<8x1xf32>
    %98 = tpu.reciprocal %97 {approx = true} : vector<8x1xf32> -> vector<8x1xf32>
    %99 = vector.broadcast %98 : vector<8x1xf32> to vector<8x8xf32>
    %100 = arith.mulf %95, %99 : vector<8x8xf32>
    %101 = arith.truncf %100 : vector<8x8xf32> to vector<8x8xbf16>
    %cst_30 = arith.constant dense<0.000000e+00> : vector<8x16xf32>
    %102 = tpu.matmul %101, %89, %cst_30 {dimension_numbers = #tpu.dot_dimension_numbers<[1], [0], [0], [1], [0, 0, 1, 1], [], []>} : vector<8x8xbf16>, vector<8x16xbf16>, vector<8x16xf32> -> vector<8x16xf32>
    %103 = tpu.concatenate %86, %102 in 1 : vector<8x16xf32>, vector<8x16xf32> -> vector<8x32xf32>
    %104 = vector.extract_strided_slice %4 {offsets = [8, 96], sizes = [8, 32], strides = [1, 1]} : vector<16x128xf32> to vector<8x32xf32>
    %105 = arith.addf %103, %104 : vector<8x32xf32>
    %cst_31 = arith.constant 0.000000e+00 : f32
    %106 = vector.broadcast %cst_31 : f32 to vector<8x32xf32>
    %107 = arith.maximumf %105, %106 : vector<8x32xf32>
    %cst_32 = arith.constant dense<0.000000e+00> : vector<8xf32>
    %108 = vector.multi_reduction <add>, %107, %cst_32 [1] : vector<8x32xf32> to vector<8xf32>
    %109 = vector.shape_cast %108 : vector<8xf32> to vector<8x1xf32>
    %cst_33 = arith.constant 3.200000e+01 : f32
    %110 = vector.broadcast %cst_33 : f32 to vector<8x1xf32>
    %111 = arith.divf %109, %110 : vector<8x1xf32>
    %112 = vector.broadcast %111 : vector<8x1xf32> to vector<8x32xf32>
    %113 = arith.subf %107, %112 : vector<8x32xf32>
    %114 = arith.mulf %113, %113 : vector<8x32xf32>
    %cst_34 = arith.constant dense<0.000000e+00> : vector<8xf32>
    %115 = vector.multi_reduction <add>, %114, %cst_34 [1] : vector<8x32xf32> to vector<8xf32>
    %116 = vector.shape_cast %115 : vector<8xf32> to vector<8x1xf32>
    %cst_35 = arith.constant 3.200000e+01 : f32
    %117 = vector.broadcast %cst_35 : f32 to vector<8x1xf32>
    %118 = arith.divf %116, %117 : vector<8x1xf32>
    %cst_36 = arith.constant 9.99999997E-7 : f32
    %119 = vector.broadcast %cst_36 : f32 to vector<8x1xf32>
    %120 = arith.addf %118, %119 : vector<8x1xf32>
    %121 = math.rsqrt %120 : vector<8x1xf32>
    %122 = vector.broadcast %121 : vector<8x1xf32> to vector<8x32xf32>
    %123 = arith.mulf %113, %122 : vector<8x32xf32>
    %c0_37 = arith.constant 0 : index
    %c0_38 = arith.constant 0 : index
    %124 = vector.load %arg3[%c0_37, %c0_38] : memref<1x32xf32, #tpu.memory_space<vmem>>, vector<1x32xf32>
    %125 = vector.broadcast %124 : vector<1x32xf32> to vector<8x32xf32>
    %126 = arith.mulf %123, %125 : vector<8x32xf32>
    %c0_39 = arith.constant 0 : index
    %c0_40 = arith.constant 0 : index
    %127 = vector.load %arg4[%c0_39, %c0_40] : memref<1x32xf32, #tpu.memory_space<vmem>>, vector<1x32xf32>
    %128 = vector.broadcast %127 : vector<1x32xf32> to vector<8x32xf32>
    %129 = arith.addf %126, %128 : vector<8x32xf32>
    %c8 = arith.constant 8 : index
    %c0_41 = arith.constant 0 : index
    %130 = vector.load %arg5[%c8, %c0_41] : memref<16x32xf32, #tpu.memory_space<vmem>>, vector<8x32xf32>
    tpu.vector_store %arg5[%c8, %c0_41], %129 {strides = array<i32>} : memref<16x32xf32, #tpu.memory_space<vmem>>, vector<8x32xf32>,
    return
  }
  func.func @transform_0(%arg0: i32) -> (i32, i32) {
    %c0_i32 = arith.constant 0 : i32
    %c0_i32_0 = arith.constant 0 : i32
    %c0_i32_1 = arith.constant 0 : i32
    return %c0_i32, %c0_i32_0 : i32, i32
  }
  func.func @transform_1(%arg0: i32) -> (i32, i32) {
    %c0_i32 = arith.constant 0 : i32
    %c0_i32_0 = arith.constant 0 : i32
    %c0_i32_1 = arith.constant 0 : i32
    return %c0_i32, %c0_i32_0 : i32, i32
  }
  func.func @transform_2(%arg0: i32) -> (i32, i32) {
    %c0_i32 = arith.constant 0 : i32
    %c0_i32_0 = arith.constant 0 : i32
    %c0_i32_1 = arith.constant 0 : i32
    return %c0_i32, %c0_i32_0 : i32, i32
  }
  func.func @transform_3(%arg0: i32) -> (i32, i32) {
    %c0_i32 = arith.constant 0 : i32
    %c0_i32_0 = arith.constant 0 : i32
    %c0_i32_1 = arith.constant 0 : i32
    return %c0_i32, %c0_i32_0 : i32, i32
  }
  func.func @transform_4(%arg0: i32) -> (i32, i32) {
    %c0_i32 = arith.constant 0 : i32
    %c0_i32_0 = arith.constant 0 : i32
    %c0_i32_1 = arith.constant 0 : i32
    return %c0_i32, %c0_i32_0 : i32, i32
  }
}

</mosaic_0001>

<llo_original>
// kernel: tpu_custom_call.1
$region0: #{tpu_custom_call.1}
  #allocation0 [shape = 'u32[]', space=smem, size = 0x4, offset = 0x4, fixed_abs, tag = 'smem constant byte address 0x4 - core index']
  #allocation1 [shape = 'u32[144,128]{1,0:T(1,128)}', space=vmem, size = 0x12000, scoped, tag = 'internal scratch']
  %s0 = inlined_call_operand.hbm [shape: f32[16,32], index: 0, kind: input, shape index: {}]
  %s1 = inlined_call_operand.hbm [shape: f32[32,128], index: 1, kind: input, shape index: {}]
  %s2 = inlined_call_operand.vmem [shape: f32[1,32], index: 2, kind: input, shape index: {}]
  %s3 = inlined_call_operand.vmem [shape: f32[1,32], index: 3, kind: input, shape index: {}]
  %s4 = inlined_call_operand.hbm [shape: f32[16,32], index: 4, kind: output, shape index: {}]
  %s5 = sld [smem:[#allocation0]]
  $region34: #{tpu_custom_call.1} parent=0
    _
  %s7 = ssub.s32 1, %s5
  %s8 = scalar_select 0, %s7, %s5
  $region1: #{tpu_custom_call.1} parent=0
    #allocation2 [shape = 'u8[8192]{0}', space=vmem, size = 0x2000, scoped, tag = 'input window, operand 0, single buffered']
    #allocation3 [shape = 's32[1]{0}', space=sflag, size = 0x4, scoped, tag = 'scoped memory for tpu_custom_call.1']
    #allocation4 [shape = 's32[1]{0}', space=sflag, size = 0x4, scoped, tag = 'scoped memory for tpu_custom_call.1']
    #allocation5 [shape = 'u8[16384]{0}', space=vmem, size = 0x4000, scoped, tag = 'input window, operand 1, single buffered']
    #allocation6 [shape = 's32[1]{0}', space=sflag, size = 0x4, scoped, tag = 'scoped memory for tpu_custom_call.1']
    #allocation7 [shape = 'u8[8192]{0}', space=vmem, size = 0x2000, scoped, tag = 'output window, operand 0, single buffered']
    %9 = vsyncpa [#allocation3], 0
    %10 = vsyncpa [#allocation6], 0
    %11 = vsyncpa [#allocation4], 0
    // Predicated region
    $region2: #{tpu_custom_call.1} parent=1 // pred_check
      _
    $region3: #{tpu_custom_call.1} parent=1 // pred_check_branch
      %13 = sbr.rel (0) target = $region5
    $region4: #{tpu_custom_call.1} parent=1 // pred_region
      %s15 = ssub.s32 256, 256
      %16 = vsyncadd [#allocation3], %s15
      %s17 = sshll.u32 [#allocation2], 4
      %s18 = int_to_ptr.vmem [resolvable:$true] %s17
      %23 = dma.hbm_to_vmem [thread:$0]  %s0, 256, %s18, [#allocation3], 128, 128, 8
    $region5: #{tpu_custom_call.1} parent=1 // pred_fallthru
      _
    // Predicated region
    $region6: #{tpu_custom_call.1} parent=1 // pred_check
      _
    $region7: #{tpu_custom_call.1} parent=1 // pred_check_branch
      %25 = sbr.rel (0) target = $region9
    $region8: #{tpu_custom_call.1} parent=1 // pred_region
      %s27 = ssub.s32 512, 512
      %28 = vsyncadd [#allocation6], %s27
      %s29 = sshll.u32 [#allocation5], 4
      %s30 = int_to_ptr.vmem [resolvable:$true] %s29
      %35 = dma.hbm_to_vmem [thread:$0]  %s1, 512, %s30, [#allocation6], 128, 128, 8
    $region9: #{tpu_custom_call.1} parent=1 // pred_fallthru
      _
    // Predicated region
    $region10: #{tpu_custom_call.1} parent=1 // pred_check
      _
    $region11: #{tpu_custom_call.1} parent=1 // pred_check_branch
      %37 = sbr.rel (0) target = $region13
    $region12: #{tpu_custom_call.1} parent=1 // pred_region
      _
    $region13: #{tpu_custom_call.1} parent=1 // pred_fallthru
      _
    // Predicated region
    $region14: #{tpu_custom_call.1} parent=1 // pred_check
      _
    $region15: #{tpu_custom_call.1} parent=1 // pred_check_branch
      %39 = sbr.rel (0) target = $region17
    $region16: #{tpu_custom_call.1} parent=1 // pred_region
      _
    $region17: #{tpu_custom_call.1} parent=1 // pred_fallthru
      _
    // Predicated region
    $region18: #{tpu_custom_call.1} parent=1 // pred_check
      _
    $region19: #{tpu_custom_call.1} parent=1 // pred_check_branch
      %41 = sbr.rel (0) target = $region21
    $region20: #{tpu_custom_call.1} parent=1 // pred_region
      %42 = dma.done [#allocation3], 256
    $region21: #{tpu_custom_call.1} parent=1 // pred_fallthru
      _
    // Predicated region
    $region22: #{tpu_custom_call.1} parent=1 // pred_check
      _
    $region23: #{tpu_custom_call.1} parent=1 // pred_check_branch
      %44 = sbr.rel (0) target = $region25
    $region24: #{tpu_custom_call.1} parent=1 // pred_region
      %45 = dma.done [#allocation6], 512
    $region25: #{tpu_custom_call.1} parent=1 // pred_fallthru
      _
    %v47 = vld [vmem:[#allocation2] sm:$0xff]
    %v48 = vld [vmem:[#allocation2 + $0x8] sm:$0xff]
    %v49 = vpack.c.bf16 %v48, %v47
    %v50 = vld [vmem:[#allocation5] sm:$0xff]
    %v51 = vld [vmem:[#allocation5 + $0x8] sm:$0xff]
    %v52 = vld [vmem:[#allocation5 + $0x10] sm:$0xff]
    %v53 = vld [vmem:[#allocation5 + $0x18] sm:$0xff]
    %v54 = vpack.c.bf16 %v51, %v50
    %v55 = vpack.c.bf16 %v53, %v52
    %vm56 = vcmask 261120
    %v58 = vsel %vm56, %v49, 0
    %60 = vmatprep.subr.bf16.mxu0 0
    %61 = vmatpush1.bf16.msra.mxu0 %v54
    %62 = vmatprep.subr.bf16.mxu0 0
    %63 = vmatpush1.bf16.msra.mxu0 %v55
    %64 = vmatprep.subr.bf16.mxu0 0
    %65 = vmatpush1.bf16.msra.mxu0 0
    %66 = vmatprep.subr.bf16.mxu0 0
    %67 = vmatpush1.bf16.msra.mxu0 0
    %68 = vmatprep.subr.bf16.mxu0 0
    %69 = vmatpush1.bf16.msra.mxu0 0
    %70 = vmatprep.subr.bf16.mxu0 0
    %71 = vmatpush1.bf16.msra.mxu0 0
    %72 = vmatprep.subr.bf16.mxu0 0
    %73 = vmatpush1.bf16.msra.mxu0 0
    %74 = vmatprep.subr.bf16.mxu0 0
    %75 = vmatpush1.bf16.msra.mxu0 0
    %76 = vmatprep.subr.bf16.mxu0 0
    %77 = vmatpush1.bf16.msra.mxu0 0
    %78 = vmatprep.subr.bf16.mxu0 0
    %79 = vmatpush1.bf16.msra.mxu0 0
    %80 = vmatprep.subr.bf16.mxu0 0
    %81 = vmatpush1.bf16.msra.mxu0 0
    %82 = vmatprep.subr.bf16.mxu0 0
    %83 = vmatpush1.bf16.msra.mxu0 0
    %84 = vmatprep.subr.bf16.mxu0 0
    %85 = vmatpush1.bf16.msra.mxu0 0
    %86 = vmatprep.subr.bf16.mxu0 0
    %87 = vmatpush1.bf16.msra.mxu0 0
    %88 = vmatprep.subr.bf16.mxu0 0
    %89 = vmatpush1.bf16.msra.mxu0 0
    %90 = vmatprep.subr.bf16.mxu0 0
    %91 = vmatpush1.bf16.msra.mxu0 0
    %92 = vmatprep.mubr.bf16.mxu0 0
    %93 = vmatmul.mubr.bf16.gmra.mrb[0].mxu0 %v58
    %v94 = vpop.f32.mrb[0].mxu0
    %v95 = vadd.f32 0.0, %v94
    %v96 = vpop.f32.mrb[0].mxu0
    %v97 = vpop.f32.mrb[0].mxu0
    %v98 = vadd.f32 0.0, %v97
    %v99 = vpop.f32.mrb[0].mxu0
    %100 = vdwg.mxu0
    %v101 = vpack.c.bf16 %v98, %v95
    %103 = vrot.lane.b32.xlu0 %v101, 96
    %v104 = vpop.permute.xlu0 %103
    %vm105 = vcmask 130048
    %v107 = vsel %vm105, %v101, 0
    %v110 = vsel %vm105, %v104, 0
    %112 = vmatprep.subr.bf16.mxu0 0
    %113 = vmatpush1.bf16.xpose.msra.mxu0 %v110
    %114 = vmatprep.subr.bf16.mxu0 0
    %115 = vmatpush1.bf16.xpose.msra.mxu0 0
    %116 = vmatprep.subr.bf16.mxu0 0
    %117 = vmatpush1.bf16.xpose.msra.mxu0 0
    %118 = vmatprep.subr.bf16.mxu0 0
    %119 = vmatpush1.bf16.xpose.msra.mxu0 0
    %120 = vmatprep.subr.bf16.mxu0 0
    %121 = vmatpush1.bf16.xpose.msra.mxu0 0
    %122 = vmatprep.subr.bf16.mxu0 0
    %123 = vmatpush1.bf16.xpose.msra.mxu0 0
    %124 = vmatprep.subr.bf16.mxu0 0
    %125 = vmatpush1.bf16.xpose.msra.mxu0 0
    %126 = vmatprep.subr.bf16.mxu0 0
    %127 = vmatpush1.bf16.xpose.msra.mxu0 0
    %128 = vmatprep.subr.bf16.mxu0 0
    %129 = vmatpush1.bf16.xpose.msra.mxu0 0
    %130 = vmatprep.subr.bf16.mxu0 0
    %131 = vmatpush1.bf16.xpose.msra.mxu0 0
    %132 = vmatprep.subr.bf16.mxu0 0
    %133 = vmatpush1.bf16.xpose.msra.mxu0 0
    %134 = vmatprep.subr.bf16.mxu0 0
    %135 = vmatpush1.bf16.xpose.msra.mxu0 0
    %136 = vmatprep.subr.bf16.mxu0 0
    %137 = vmatpush1.bf16.xpose.msra.mxu0 0
    %138 = vmatprep.subr.bf16.mxu0 0
    %139 = vmatpush1.bf16.xpose.msra.mxu0 0
    %140 = vmatprep.subr.bf16.mxu0 0
    %141 = vmatpush1.bf16.xpose.msra.mxu0 0
    %142 = vmatprep.subr.bf16.mxu0 0
    %143 = vmatpush1.bf16.xpose.msra.mxu0 0
    %144 = vmatprep.mubr.bf16.mxu0 0
    %145 = vmatmul.mubr.bf16.gmra.mrb[0].mxu0 %v107
    %v146 = vpop.f32.mrb[0].mxu0
    %v147 = vadd.f32 0.0, %v146
    %v148 = vpop.f32.mrb[0].mxu0
    %v149 = vpop.f32.mrb[0].mxu0
    %v150 = vpop.f32.mrb[0].mxu0
    %151 = vdwg.mxu0
    %vm152 = vcmask 64512
    %v153 = vsel %vm152, %v147, -inf
    %154 = vmax.xlane.f32.xlu0 %v153
    %v155 = vpop.xlane.xlu0 %154
    %v156 = vsub.f32 %v147, %v155
    %v157 = vmul.f32 %v156, 1.442695
    %v158 = vpow.pop %v157
    %v159 = vsel %vm152, %v158, 0.0
    %160 = vadd.xlane.f32.xlu0 %v159
    %v161 = vpop.xlane.xlu0 %160
    %v162 = vrcp.pop %v161
    %v163 = vmul.f32 %v158, %v162
    %v164 = vpack.c.bf16 %v163, %v163
    %165 = vrot.lane.b32.xlu0 %v101, 64
    %v166 = vpop.permute.xlu0 %165
    %v168 = vsel %vm152, %v164, 0
    %vm170 = vcmask 1043456
    %v172 = vsel %vm170, %v166, 0
    %174 = vmatprep.subr.bf16.mxu0 0
    %175 = vmatpush1.bf16.msra.mxu0 %v172
    %176 = vmatprep.subr.bf16.mxu0 0
    %177 = vmatpush1.bf16.msra.mxu0 0
    %178 = vmatprep.subr.bf16.mxu0 0
    %179 = vmatpush1.bf16.msra.mxu0 0
    %180 = vmatprep.subr.bf16.mxu0 0
    %181 = vmatpush1.bf16.msra.mxu0 0
    %182 = vmatprep.subr.bf16.mxu0 0
    %183 = vmatpush1.bf16.msra.mxu0 0
    %184 = vmatprep.subr.bf16.mxu0 0
    %185 = vmatpush1.bf16.msra.mxu0 0
    %186 = vmatprep.subr.bf16.mxu0 0
    %187 = vmatpush1.bf16.msra.mxu0 0
    %188 = vmatprep.subr.bf16.mxu0 0
    %189 = vmatpush1.bf16.msra.mxu0 0
    %190 = vmatprep.subr.bf16.mxu0 0
    %191 = vmatpush1.bf16.msra.mxu0 0
    %192 = vmatprep.subr.bf16.mxu0 0
    %193 = vmatpush1.bf16.msra.mxu0 0
    %194 = vmatprep.subr.bf16.mxu0 0
    %195 = vmatpush1.bf16.msra.mxu0 0
    %196 = vmatprep.subr.bf16.mxu0 0
    %197 = vmatpush1.bf16.msra.mxu0 0
    %198 = vmatprep.subr.bf16.mxu0 0
    %199 = vmatpush1.bf16.msra.mxu0 0
    %200 = vmatprep.subr.bf16.mxu0 0
    %201 = vmatpush1.bf16.msra.mxu0 0
    %202 = vmatprep.subr.bf16.mxu0 0
    %203 = vmatpush1.bf16.msra.mxu0 0
    %204 = vmatprep.subr.bf16.mxu0 0
    %205 = vmatpush1.bf16.msra.mxu0 0
    %206 = vmatprep.mubr.bf16.mxu0 0
    %207 = vmatmul.mubr.bf16.gmra.mrb[0].mxu0 %v168
    %v208 = vpop.f32.mrb[0].mxu0
    %v209 = vadd.f32 0.0, %v208
    %v210 = vpop.f32.mrb[0].mxu0
    %v211 = vpop.f32.mrb[0].mxu0
    %v212 = vpop.f32.mrb[0].mxu0
    %213 = vdwg.mxu0
    %214 = vrot.lane.b32.xlu0 %v101, 112
    %v215 = vpop.permute.xlu0 %214
    %216 = vrot.lane.b32.xlu0 %v101, 80
    %v217 = vpop.permute.xlu0 %216
    %v219 = vsel %vm105, %v215, 0
    %v222 = vsel %vm105, %v217, 0
    %224 = vmatprep.subr.bf16.mxu0 0
    %225 = vmatpush1.bf16.xpose.msra.mxu0 %v222
    %226 = vmatprep.subr.bf16.mxu0 0
    %227 = vmatpush1.bf16.xpose.msra.mxu0 0
    %228 = vmatprep.subr.bf16.mxu0 0
    %229 = vmatpush1.bf16.xpose.msra.mxu0 0
    %230 = vmatprep.subr.bf16.mxu0 0
    %231 = vmatpush1.bf16.xpose.msra.mxu0 0
    %232 = vmatprep.subr.bf16.mxu0 0
    %233 = vmatpush1.bf16.xpose.msra.mxu0 0
    %234 = vmatprep.subr.bf16.mxu0 0
    %235 = vmatpush1.bf16.xpose.msra.mxu0 0
    %236 = vmatprep.subr.bf16.mxu0 0
    %237 = vmatpush1.bf16.xpose.msra.mxu0 0
    %238 = vmatprep.subr.bf16.mxu0 0
    %239 = vmatpush1.bf16.xpose.msra.mxu0 0
    %240 = vmatprep.subr.bf16.mxu0 0
    %241 = vmatpush1.bf16.xpose.msra.mxu0 0
    %242 = vmatprep.subr.bf16.mxu0 0
    %243 = vmatpush1.bf16.xpose.msra.mxu0 0
    %244 = vmatprep.subr.bf16.mxu0 0
    %245 = vmatpush1.bf16.xpose.msra.mxu0 0
    %246 = vmatprep.subr.bf16.mxu0 0
    %247 = vmatpush1.bf16.xpose.msra.mxu0 0
    %248 = vmatprep.subr.bf16.mxu0 0
    %249 = vmatpush1.bf16.xpose.msra.mxu0 0
    %250 = vmatprep.subr.bf16.mxu0 0
    %251 = vmatpush1.bf16.xpose.msra.mxu0 0
    %252 = vmatprep.subr.bf16.mxu0 0
    %253 = vmatpush1.bf16.xpose.msra.mxu0 0
    %254 = vmatprep.subr.bf16.mxu0 0
    %255 = vmatpush1.bf16.xpose.msra.mxu0 0
    %256 = vmatprep.mubr.bf16.mxu0 0
    %257 = vmatmul.mubr.bf16.gmra.mrb[0].mxu0 %v219
    %v258 = vpop.f32.mrb[0].mxu0
    %v259 = vadd.f32 0.0, %v258
    %v260 = vpop.f32.mrb[0].mxu0
    %v261 = vpop.f32.mrb[0].mxu0
    %v262 = vpop.f32.mrb[0].mxu0
    %263 = vdwg.mxu0
    %v264 = vsel %vm152, %v259, -inf
    %265 = vmax.xlane.f32.xlu0 %v264
    %v266 = vpop.xlane.xlu0 %265
    %v267 = vsub.f32 %v259, %v266
    %v268 = vmul.f32 %v267, 1.442695
    %v269 = vpow.pop %v268
    %v270 = vsel %vm152, %v269, 0.0
    %271 = vadd.xlane.f32.xlu0 %v270
    %v272 = vpop.xlane.xlu0 %271
    %v273 = vrcp.pop %v272
    %v274 = vmul.f32 %v269, %v273
    %v275 = vpack.c.bf16 %v274, %v274
    %276 = vrot.lane.b32.xlu0 %v101, 48
    %v277 = vpop.permute.xlu0 %276
    %v279 = vsel %vm152, %v275, 0
    %v282 = vsel %vm170, %v277, 0
    %284 = vmatprep.subr.bf16.mxu0 0
    %285 = vmatpush1.bf16.msra.mxu0 %v282
    %286 = vmatprep.subr.bf16.mxu0 0
    %287 = vmatpush1.bf16.msra.mxu0 0
    %288 = vmatprep.subr.bf16.mxu0 0
    %289 = vmatpush1.bf16.msra.mxu0 0
    %290 = vmatprep.subr.bf16.mxu0 0
    %291 = vmatpush1.bf16.msra.mxu0 0
    %292 = vmatprep.subr.bf16.mxu0 0
    %293 = vmatpush1.bf16.msra.mxu0 0
    %294 = vmatprep.subr.bf16.mxu0 0
    %295 = vmatpush1.bf16.msra.mxu0 0
    %296 = vmatprep.subr.bf16.mxu0 0
    %297 = vmatpush1.bf16.msra.mxu0 0
    %298 = vmatprep.subr.bf16.mxu0 0
    %299 = vmatpush1.bf16.msra.mxu0 0
    %300 = vmatprep.subr.bf16.mxu0 0
    %301 = vmatpush1.bf16.msra.mxu0 0
    %302 = vmatprep.subr.bf16.mxu0 0
    %303 = vmatpush1.bf16.msra.mxu0 0
    %304 = vmatprep.subr.bf16.mxu0 0
    %305 = vmatpush1.bf16.msra.mxu0 0
    %306 = vmatprep.subr.bf16.mxu0 0
    %307 = vmatpush1.bf16.msra.mxu0 0
    %308 = vmatprep.subr.bf16.mxu0 0
    %309 = vmatpush1.bf16.msra.mxu0 0
    %310 = vmatprep.subr.bf16.mxu0 0
    %311 = vmatpush1.bf16.msra.mxu0 0
    %312 = vmatprep.subr.bf16.mxu0 0
    %313 = vmatpush1.bf16.msra.mxu0 0
    %314 = vmatprep.subr.bf16.mxu0 0
    %315 = vmatpush1.bf16.msra.mxu0 0
    %316 = vmatprep.mubr.bf16.mxu0 0
    %317 = vmatmul.mubr.bf16.gmra.mrb[0].mxu0 %v279
    %v318 = vpop.f32.mrb[0].mxu0
    %v319 = vadd.f32 0.0, %v318
    %v320 = vpop.f32.mrb[0].mxu0
    %v321 = vpop.f32.mrb[0].mxu0
    %v322 = vpop.f32.mrb[0].mxu0
    %323 = vdwg.mxu0
    %325 = vrot.lane.b32.xlu0 %v319, 16
    %v326 = vpop.permute.xlu0 %325
    %v328 = vsel %vm105, %v209, %v326
    %330 = vrot.lane.b32.xlu0 %v95, 32
    %v331 = vpop.permute.xlu0 %330
    %v333 = vadd.f32 %v328, %v331
    %v334 = vmax.f32 %v333, 0.0
    %v335 = vsel %vm56, %v334, 0.0
    %336 = vadd.xlane.f32.xlu0 %v335
    %v337 = vpop.xlane.xlu0 %336
    %v338 = vrcp.pop 32.0
    %v339 = vmul.f32 %v337, %v338
    %v340 = vsub.f32 %v334, %v339
    %v341 = vmul.f32 %v340, %v340
    %v342 = vsel %vm56, %v341, 0.0
    %343 = vadd.xlane.f32.xlu0 %v342
    %v344 = vpop.xlane.xlu0 %343
    %v345 = vmul.f32 %v344, %v338
    %v346 = vadd.f32 %v345, 1e-06
    %v347 = vrsqrt.pop %v346
    %v348 = vmul.f32 %v340, %v347
    %v349 = vld [vmem:[%s2] sm:$0x1]
    %v351 = vlaneseq
    %v352 = vshrl.u32 %v351, 7
    %v353 = vsub.s32 0, %v352
    %v354 = vrot.slane %v349, %v353
    %v356 = vmul.f32 %v348, %v354
    %v357 = vld [vmem:[%s3] sm:$0x1]
    %v359 = vlaneseq
    %v360 = vshrl.u32 %v359, 7
    %v361 = vsub.s32 0, %v360
    %v362 = vrot.slane %v357, %v361
    %v364 = vadd.f32 %v356, %v362
    %365 = vst.msk [vmem:[#allocation7] sm:$0xff] %vm56, %v364
    %v366 = vrot.slane %v101, 4
    %367 = vrot.lane.b32.xlu0 %v366, 96
    %v368 = vpop.permute.xlu0 %367
    %v370 = vsel %vm105, %v366, 0
    %v373 = vsel %vm105, %v368, 0
    %375 = vmatprep.subr.bf16.mxu0 0
    %376 = vmatpush1.bf16.xpose.msra.mxu0 %v373
    %377 = vmatprep.subr.bf16.mxu0 0
    %378 = vmatpush1.bf16.xpose.msra.mxu0 0
    %379 = vmatprep.subr.bf16.mxu0 0
    %380 = vmatpush1.bf16.xpose.msra.mxu0 0
    %381 = vmatprep.subr.bf16.mxu0 0
    %382 = vmatpush1.bf16.xpose.msra.mxu0 0
    %383 = vmatprep.subr.bf16.mxu0 0
    %384 = vmatpush1.bf16.xpose.msra.mxu0 0
    %385 = vmatprep.subr.bf16.mxu0 0
    %386 = vmatpush1.bf16.xpose.msra.mxu0 0
    %387 = vmatprep.subr.bf16.mxu0 0
    %388 = vmatpush1.bf16.xpose.msra.mxu0 0
    %389 = vmatprep.subr.bf16.mxu0 0
    %390 = vmatpush1.bf16.xpose.msra.mxu0 0
    %391 = vmatprep.subr.bf16.mxu0 0
    %392 = vmatpush1.bf16.xpose.msra.mxu0 0
    %393 = vmatprep.subr.bf16.mxu0 0
    %394 = vmatpush1.bf16.xpose.msra.mxu0 0
    %395 = vmatprep.subr.bf16.mxu0 0
    %396 = vmatpush1.bf16.xpose.msra.mxu0 0
    %397 = vmatprep.subr.bf16.mxu0 0
    %398 = vmatpush1.bf16.xpose.msra.mxu0 0
    %399 = vmatprep.subr.bf16.mxu0 0
    %400 = vmatpush1.bf16.xpose.msra.mxu0 0
    %401 = vmatprep.subr.bf16.mxu0 0
    %402 = vmatpush1.bf16.xpose.msra.mxu0 0
    %403 = vmatprep.subr.bf16.mxu0 0
    %404 = vmatpush1.bf16.xpose.msra.mxu0 0
    %405 = vmatprep.subr.bf16.mxu0 0
    %406 = vmatpush1.bf16.xpose.msra.mxu0 0
    %407 = vmatprep.mubr.bf16.mxu0 0
    %408 = vmatmul.mubr.bf16.gmra.mrb[0].mxu0 %v370
    %v409 = vpop.f32.mrb[0].mxu0
    %v410 = vadd.f32 0.0, %v409
    %v411 = vpop.f32.mrb[0].mxu0
    %v412 = vpop.f32.mrb[0].mxu0
    %v413 = vpop.f32.mrb[0].mxu0
    %414 = vdwg.mxu0
    %v415 = vsel %vm152, %v410, -inf
    %416 = vmax.xlane.f32.xlu0 %v415
    %v417 = vpop.xlane.xlu0 %416
    %v418 = vsub.f32 %v410, %v417
    %v419 = vmul.f32 %v418, 1.442695
    %v420 = vpow.pop %v419
    %v421 = vsel %vm152, %v420, 0.0
    %422 = vadd.xlane.f32.xlu0 %v421
    %v423 = vpop.xlane.xlu0 %422
    %v424 = vrcp.pop %v423
    %v425 = vmul.f32 %v420, %v424
    %v426 = vpack.c.bf16 %v425, %v425
    %427 = vrot.lane.b32.xlu0 %v366, 64
    %v428 = vpop.permute.xlu0 %427
    %v430 = vsel %vm152, %v426, 0
    %v433 = vsel %vm170, %v428, 0
    %435 = vmatprep.subr.bf16.mxu0 0
    %436 = vmatpush1.bf16.msra.mxu0 %v433
    %437 = vmatprep.subr.bf16.mxu0 0
    %438 = vmatpush1.bf16.msra.mxu0 0
    %439 = vmatprep.subr.bf16.mxu0 0
    %440 = vmatpush1.bf16.msra.mxu0 0
    %441 = vmatprep.subr.bf16.mxu0 0
    %442 = vmatpush1.bf16.msra.mxu0 0
    %443 = vmatprep.subr.bf16.mxu0 0
    %444 = vmatpush1.bf16.msra.mxu0 0
    %445 = vmatprep.subr.bf16.mxu0 0
    %446 = vmatpush1.bf16.msra.mxu0 0
    %447 = vmatprep.subr.bf16.mxu0 0
    %448 = vmatpush1.bf16.msra.mxu0 0
    %449 = vmatprep.subr.bf16.mxu0 0
    %450 = vmatpush1.bf16.msra.mxu0 0
    %451 = vmatprep.subr.bf16.mxu0 0
    %452 = vmatpush1.bf16.msra.mxu0 0
    %453 = vmatprep.subr.bf16.mxu0 0
    %454 = vmatpush1.bf16.msra.mxu0 0
    %455 = vmatprep.subr.bf16.mxu0 0
    %456 = vmatpush1.bf16.msra.mxu0 0
    %457 = vmatprep.subr.bf16.mxu0 0
    %458 = vmatpush1.bf16.msra.mxu0 0
    %459 = vmatprep.subr.bf16.mxu0 0
    %460 = vmatpush1.bf16.msra.mxu0 0
    %461 = vmatprep.subr.bf16.mxu0 0
    %462 = vmatpush1.bf16.msra.mxu0 0
    %463 = vmatprep.subr.bf16.mxu0 0
    %464 = vmatpush1.bf16.msra.mxu0 0
    %465 = vmatprep.subr.bf16.mxu0 0
    %466 = vmatpush1.bf16.msra.mxu0 0
    %467 = vmatprep.mubr.bf16.mxu0 0
    %468 = vmatmul.mubr.bf16.gmra.mrb[0].mxu0 %v430
    %v469 = vpop.f32.mrb[0].mxu0
    %v470 = vadd.f32 0.0, %v469
    %v471 = vpop.f32.mrb[0].mxu0
    %v472 = vpop.f32.mrb[0].mxu0
    %v473 = vpop.f32.mrb[0].mxu0
    %474 = vdwg.mxu0
    %475 = vrot.lane.b32.xlu0 %v366, 112
    %v476 = vpop.permute.xlu0 %475
    %477 = vrot.lane.b32.xlu0 %v366, 80
    %v478 = vpop.permute.xlu0 %477
    %v480 = vsel %vm105, %v476, 0
    %v483 = vsel %vm105, %v478, 0
    %485 = vmatprep.subr.bf16.mxu0 0
    %486 = vmatpush1.bf16.xpose.msra.mxu0 %v483
    %487 = vmatprep.subr.bf16.mxu0 0
    %488 = vmatpush1.bf16.xpose.msra.mxu0 0
    %489 = vmatprep.subr.bf16.mxu0 0
    %490 = vmatpush1.bf16.xpose.msra.mxu0 0
    %491 = vmatprep.subr.bf16.mxu0 0
    %492 = vmatpush1.bf16.xpose.msra.mxu0 0
    %493 = vmatprep.subr.bf16.mxu0 0
    %494 = vmatpush1.bf16.xpose.msra.mxu0 0
    %495 = vmatprep.subr.bf16.mxu0 0
    %496 = vmatpush1.bf16.xpose.msra.mxu0 0
    %497 = vmatprep.subr.bf16.mxu0 0
    %498 = vmatpush1.bf16.xpose.msra.mxu0 0
    %499 = vmatprep.subr.bf16.mxu0 0
    %500 = vmatpush1.bf16.xpose.msra.mxu0 0
    %501 = vmatprep.subr.bf16.mxu0 0
    %502 = vmatpush1.bf16.xpose.msra.mxu0 0
    %503 = vmatprep.subr.bf16.mxu0 0
    %504 = vmatpush1.bf16.xpose.msra.mxu0 0
    %505 = vmatprep.subr.bf16.mxu0 0
    %506 = vmatpush1.bf16.xpose.msra.mxu0 0
    %507 = vmatprep.subr.bf16.mxu0 0
    %508 = vmatpush1.bf16.xpose.msra.mxu0 0
    %509 = vmatprep.subr.bf16.mxu0 0
    %510 = vmatpush1.bf16.xpose.msra.mxu0 0
    %511 = vmatprep.subr.bf16.mxu0 0
    %512 = vmatpush1.bf16.xpose.msra.mxu0 0
    %513 = vmatprep.subr.bf16.mxu0 0
    %514 = vmatpush1.bf16.xpose.msra.mxu0 0
    %515 = vmatprep.subr.bf16.mxu0 0
    %516 = vmatpush1.bf16.xpose.msra.mxu0 0
    %517 = vmatprep.mubr.bf16.mxu0 0
    %518 = vmatmul.mubr.bf16.gmra.mrb[0].mxu0 %v480
    %v519 = vpop.f32.mrb[0].mxu0
    %v520 = vadd.f32 0.0, %v519
    %v521 = vpop.f32.mrb[0].mxu0
    %v522 = vpop.f32.mrb[0].mxu0
    %v523 = vpop.f32.mrb[0].mxu0
    %524 = vdwg.mxu0
    %v525 = vsel %vm152, %v520, -inf
    %526 = vmax.xlane.f32.xlu0 %v525
    %v527 = vpop.xlane.xlu0 %526
    %v528 = vsub.f32 %v520, %v527
    %v529 = vmul.f32 %v528, 1.442695
    %v530 = vpow.pop %v529
    %v531 = vsel %vm152, %v530, 0.0
    %532 = vadd.xlane.f32.xlu0 %v531
    %v533 = vpop.xlane.xlu0 %532
    %v534 = vrcp.pop %v533
    %v535 = vmul.f32 %v530, %v534
    %v536 = vpack.c.bf16 %v535, %v535
    %537 = vrot.lane.b32.xlu0 %v366, 48
    %v538 = vpop.permute.xlu0 %537
    %v540 = vsel %vm152, %v536, 0
    %v543 = vsel %vm170, %v538, 0
    %545 = vmatprep.subr.bf16.mxu0 0
    %546 = vmatpush1.bf16.msra.mxu0 %v543
    %547 = vmatprep.subr.bf16.mxu0 0
    %548 = vmatpush1.bf16.msra.mxu0 0
    %549 = vmatprep.subr.bf16.mxu0 0
    %550 = vmatpush1.bf16.msra.mxu0 0
    %551 = vmatprep.subr.bf16.mxu0 0
    %552 = vmatpush1.bf16.msra.mxu0 0
    %553 = vmatprep.subr.bf16.mxu0 0
    %554 = vmatpush1.bf16.msra.mxu0 0
    %555 = vmatprep.subr.bf16.mxu0 0
    %556 = vmatpush1.bf16.msra.mxu0 0
    %557 = vmatprep.subr.bf16.mxu0 0
    %558 = vmatpush1.bf16.msra.mxu0 0
    %559 = vmatprep.subr.bf16.mxu0 0
    %560 = vmatpush1.bf16.msra.mxu0 0
    %561 = vmatprep.subr.bf16.mxu0 0
    %562 = vmatpush1.bf16.msra.mxu0 0
    %563 = vmatprep.subr.bf16.mxu0 0
    %564 = vmatpush1.bf16.msra.mxu0 0
    %565 = vmatprep.subr.bf16.mxu0 0
    %566 = vmatpush1.bf16.msra.mxu0 0
    %567 = vmatprep.subr.bf16.mxu0 0
    %568 = vmatpush1.bf16.msra.mxu0 0
    %569 = vmatprep.subr.bf16.mxu0 0
    %570 = vmatpush1.bf16.msra.mxu0 0
    %571 = vmatprep.subr.bf16.mxu0 0
    %572 = vmatpush1.bf16.msra.mxu0 0
    %573 = vmatprep.subr.bf16.mxu0 0
    %574 = vmatpush1.bf16.msra.mxu0 0
    %575 = vmatprep.subr.bf16.mxu0 0
    %576 = vmatpush1.bf16.msra.mxu0 0
    %577 = vmatprep.mubr.bf16.mxu0 0
    %578 = vmatmul.mubr.bf16.gmra.mrb[0].mxu0 %v540
    %v579 = vpop.f32.mrb[0].mxu0
    %v580 = vadd.f32 0.0, %v579
    %v581 = vpop.f32.mrb[0].mxu0
    %v582 = vpop.f32.mrb[0].mxu0
    %v583 = vpop.f32.mrb[0].mxu0
    %584 = vdwg.mxu0
    %586 = vrot.lane.b32.xlu0 %v580, 16
    %v587 = vpop.permute.xlu0 %586
    %v589 = vsel %vm105, %v470, %v587
    %591 = vrot.lane.b32.xlu0 %v98, 32
    %v592 = vpop.permute.xlu0 %591
    %v594 = vadd.f32 %v589, %v592
    %v595 = vmax.f32 %v594, 0.0
    %v596 = vsel %vm56, %v595, 0.0
    %597 = vadd.xlane.f32.xlu0 %v596
    %v598 = vpop.xlane.xlu0 %597
    %v599 = vmul.f32 %v598, %v338
    %v600 = vsub.f32 %v595, %v599
    %v601 = vmul.f32 %v600, %v600
    %v602 = vsel %vm56, %v601, 0.0
    %603 = vadd.xlane.f32.xlu0 %v602
    %v604 = vpop.xlane.xlu0 %603
    %v605 = vmul.f32 %v604, %v338
    %v606 = vadd.f32 %v605, 1e-06
    %v607 = vrsqrt.pop %v606
    %v608 = vmul.f32 %v600, %v607
    %v609 = vld [vmem:[%s2] sm:$0x1]
    %v611 = vlaneseq
    %v612 = vshrl.u32 %v611, 7
    %v613 = vsub.s32 0, %v612
    %v614 = vrot.slane %v609, %v613
    %v616 = vmul.f32 %v608, %v614
    %v617 = vld [vmem:[%s3] sm:$0x1]
    %v619 = vlaneseq
    %v620 = vshrl.u32 %v619, 7
    %v621 = vsub.s32 0, %v620
    %v622 = vrot.slane %v617, %v621
    %v624 = vadd.f32 %v616, %v622
    %625 = vst.msk [vmem:[#allocation7 + $0x8] sm:$0xff] %vm56, %v624
    // Predicated region
    $region26: #{tpu_custom_call.1} parent=1 // pred_check
      _
    $region27: #{tpu_custom_call.1} parent=1 // pred_check_branch
      %627 = sbr.rel (0) target = $region29
    $region28: #{tpu_custom_call.1} parent=1 // pred_region
      %s629 = ssub.s32 256, 256
      %630 = vsyncadd [#allocation4], %s629
      %s631 = sshll.u32 [#allocation7], 4
      %s632 = int_to_ptr.vmem [resolvable:$true] %s631
      %637 = dma.vmem_to_hbm [thread:$0]  %s632, 256, %s4, [#allocation4], 128, 128, 8
    $region29: #{tpu_custom_call.1} parent=1 // pred_fallthru
      _
    // Predicated region
    $region30: #{tpu_custom_call.1} parent=1 // pred_check
      _
    $region31: #{tpu_custom_call.1} parent=1 // pred_check_branch
      %639 = sbr.rel (0) target = $region33
    $region32: #{tpu_custom_call.1} parent=1 // pred_region
      %640 = dma.done [#allocation4], 256
    $region33: #{tpu_custom_call.1} parent=1 // pred_fallthru
      _
    %641 = vsyncpa [#allocation3], 1
    %642 = vsyncpa [#allocation6], 1
    %643 = vsyncpa [#allocation4], 1

</llo_original>
